<compile_context>
chip_gen: v7x
topology: tpu7x:2x2x1
jax: 0.10.0
libtpu: 0.0.40
codegen_flags: <defaults>
</compile_context>

<pallas_src>
import math

import jax
import jax.numpy as jnp
from jax.experimental import pallas as pl
from jax.experimental.pallas import tpu as pltpu

LAMB = 1.0          # HGPSLPool lamb
NEG_SLOPE = 0.2     # leaky_relu negative slope in structure learning
POOL_RATIO = 0.5
LANE = 128
_VMEM_LIMIT = 48 * 1024 * 1024   # stay under v7x's 64 MiB physical VMEM

# dot_general dimension numbers: contract last dims of both operands (A @ B.T)
_DN = (((1,), (1,)), ((), ()))


# ----------------------------------------------------------------------------
# helpers
# ----------------------------------------------------------------------------
def _pad_lanes(a, axis=-1, mult=LANE):
    n = a.shape[axis]
    p = (-n) % mult
    if p == 0:
        return a
    pads = [(0, 0)] * a.ndim
    pads[axis] = (0, p)
    return jnp.pad(a, pads)


def _choose_tile(n, target=256):
    """Largest row tile <= target that divides n (multiple of 8), else the full dim."""
    if n <= target:
        return n
    # TODO(synk): production should support ragged edge tiles and a tiled reduction
    # (k) axis for N large enough that a (tm, N) bf16 slab no longer fits VMEM.
    for t in range(target, 0, -8):
        if n % t == 0:
            return t
    return n


def _full(shape):
    nd = len(shape)
    return pl.BlockSpec(tuple(shape), lambda i, _nd=nd: (0,) * _nd)


# ----------------------------------------------------------------------------
# Pallas kernels
# ----------------------------------------------------------------------------
def gcn_conv_kernel(a_ref, xs_ref, dsl_ref, w_ref, b_ref, h_ref):
    """Row tile of  h = relu( D_sl^-1/2 (A + I) D_sl^-1/2 x W + b ).

    a_ref : (tm, N) bf16 adjacency row tile (no explicit self loops)
    xs_ref: (N, Fp) f32  = dsl * x   (resident full block)
    dsl   : (N, 1)  f32  rsqrt(deg + 1)
    """
    i = pl.program_id(0)
    tm = a_ref.shape[0]
    row0 = pl.multiple_of(i * tm, tm)

    xs = xs_ref[...]
    ax = jnp.dot(a_ref[...], xs.astype(jnp.bfloat16),
                 preferred_element_type=jnp.float32)                 # (tm, Fp)
    ax = dsl_ref[pl.ds(row0, tm), :] * (ax + xs_ref[pl.ds(row0, tm), :])
    h = jnp.dot(ax, w_ref[...], preferred_element_type=jnp.float32) + b_ref[...]
    h_ref[...] = jnp.maximum(h, 0.0)


def info_score_kernel(a_ref, h_ref, dl_ref, s_ref):
    """Row tile of  s = rowsum | h - D^-1/2 A D^-1/2 h |  (node information score).

    h stays resident as a full VMEM block; only A streams per row tile.
    """
    i = pl.program_id(0)
    tm = a_ref.shape[0]
    row0 = pl.multiple_of(i * tm, tm)

    dlh = (dl_ref[...] * h_ref[...]).astype(jnp.bfloat16)            # (N, Hp)
    agg = jnp.dot(a_ref[...], dlh, preferred_element_type=jnp.float32)
    t = h_ref[pl.ds(row0, tm), :] - dl_ref[pl.ds(row0, tm), :] * agg
    s_ref[...] = jnp.sum(jnp.abs(t), axis=-1, keepdims=True)         # (tm, 1)


def sl_attention_kernel(xk_ref, att_ref, hop_ref, mask_ref, adj_ref):
    """Structure learning: w_ij = leaky_relu(x_i.a_src + x_j.a_dst) + lamb*hop_ij,
    masked row-softmax over admissible (<=3-hop, same-graph) edges. Row-tiled.
    # TODO(synk): HGP-SL uses sparsemax (Sparse Attention); approximated by masked softmax.
    """
    i = pl.program_id(0)
    tr = hop_ref.shape[0]
    row0 = pl.multiple_of(i * tr, tr)

    xk_i = xk_ref[pl.ds(row0, tr), :]                                # (tr, Hp)
    # fused src/dst projection for the tile rows -> one MXU push, take src column
    s2 = jax.lax.dot_general(xk_i, att_ref[...], _DN,
                             preferred_element_type=jnp.float32)     # (tr, 2)
    s_src = s2[:, 0:1]                                               # (tr, 1)
    # lane-dense dst projection across all K columns
    s_dst = jax.lax.dot_general(att_ref[1:2, :], xk_ref[...], _DN,
                                preferred_element_type=jnp.float32)  # (1, K)
    w = s_src + s_dst                                                # (tr, K)
    w = jnp.where(w > 0, w, NEG_SLOPE * w)
    w = w + LAMB * hop_ref[...]
    w = jnp.where(mask_ref[...] > 0.0, w, -1e30)
    w = w - jnp.max(w, axis=-1, keepdims=True)
    e = jnp.exp(w)          # masked entries underflow to exactly 0 (diag keeps max finite)
    denom = jnp.sum(e, axis=-1, keepdims=True)                       # >= 1 always
    adj_ref[...] = e * pl.reciprocal(denom, approx=True)


def conv3_readout_head_kernel(xk1_ref, at1_ref, an1_ref,
                              xk2_ref, at2_ref, an2_ref,
                              a2_ref, dsl2_ref, w3_ref, b3_ref,
                              l1wg_ref, l1wa_ref, l1b_ref,
                              l2w_ref, l2b_ref, l3w_ref, l3b_ref,
                              o_ref, gmp_ref):
    """Fused conv3 + three (gmp||gap) readouts + 3-layer MLP head + log_softmax."""
    # conv3 on the pool2 graph (same normalization trick as gcn_conv_kernel)
    xk2 = xk2_ref[...]
    dsl2 = dsl2_ref[...]
    xs = dsl2 * xk2
    ax = dsl2 * (jnp.dot(a2_ref[...], xs.astype(jnp.bfloat16),
                         preferred_element_type=jnp.float32) + xs)
    h3 = jnp.maximum(jnp.dot(ax, w3_ref[...], preferred_element_type=jnp.float32)
                     + b3_ref[...], 0.0)

    xk1 = xk1_ref[...]
    G = gmp_ref.shape[0]

    def gmp_accumulate(x, assign_t, first):
        # arithmetic masking (FMA instead of cmp+select) + per-graph scratch rows,
        # no (G, N, H) broadcast and no chained where over graphs.
        for g in range(G):
            col = assign_t[:, g:g + 1]                               # (K, 1)
            masked = x + (col - 1.0) * 1e30
            m = jnp.maximum(jnp.max(masked, axis=0, keepdims=True), 0.0)   # relu'd (1, Hp)
            if first:
                gmp_ref[pl.ds(g, 1), :] = m
            else:
                gmp_ref[pl.ds(g, 1), :] = gmp_ref[pl.ds(g, 1), :] + m

    gmp_accumulate(xk1, at1_ref[...], True)
    gmp_accumulate(xk2, at2_ref[...], False)
    gmp_accumulate(h3, at2_ref[...], False)

    # mean pool as a single matmul with pre-normalized membership rows
    gap1 = jnp.dot(an1_ref[...], xk1, preferred_element_type=jnp.float32)
    gap2 = jnp.dot(an2_ref[...], xk2, preferred_element_type=jnp.float32)
    gap3 = jnp.dot(an2_ref[...], h3, preferred_element_type=jnp.float32)
    gap_s = (jnp.maximum(gap1, 0.0) + jnp.maximum(gap2, 0.0) + jnp.maximum(gap3, 0.0))
    gmp_s = gmp_ref[...]

    # lin1 applied as two matmuls on the two H-wide slabs (no lane-axis concat)
    h = (jnp.dot(gmp_s, l1wg_ref[...], preferred_element_type=jnp.float32)
         + jnp.dot(gap_s, l1wa_ref[...], preferred_element_type=jnp.float32)
         + l1b_ref[...])
    h = jnp.maximum(h, 0.0)
    # TODO(synk): dropout(p=0.1) omitted (eval mode -> identity).
    h = jnp.maximum(jnp.dot(h, l2w_ref[...], preferred_element_type=jnp.float32)
                    + l2b_ref[...], 0.0)
    z = jnp.dot(h, l3w_ref[...], preferred_element_type=jnp.float32) + l3b_ref[...]
    z = z - jnp.max(z, axis=-1, keepdims=True)
    o_ref[...] = z - jnp.log(jnp.sum(jnp.exp(z), axis=-1, keepdims=True))


# ----------------------------------------------------------------------------
# pallas_call wrappers (row-tiled grids, "parallel" node-row axis for megacore)
# ----------------------------------------------------------------------------
def gcn_conv(xs, A_bf, dsl, w, b):
    N, Fp = xs.shape
    Hp = w.shape[1]
    tm = _choose_tile(N)
    return pl.pallas_call(
        gcn_conv_kernel,
        grid=(N // tm,),
        in_specs=[
            pl.BlockSpec((tm, N), lambda i: (i, 0)),      # A row tile streams
            pl.BlockSpec((N, Fp), lambda i: (0, 0)),      # xs resident
            pl.BlockSpec((N, 1), lambda i: (0, 0)),
            pl.BlockSpec((Fp, Hp), lambda i: (0, 0)),
            pl.BlockSpec((1, Hp), lambda i: (0, 0)),
        ],
        out_specs=pl.BlockSpec((tm, Hp), lambda i: (i, 0)),
        out_shape=jax.ShapeDtypeStruct((N, Hp), jnp.float32),
        compiler_params=pltpu.CompilerParams(
            dimension_semantics=("parallel",), vmem_limit_bytes=_VMEM_LIMIT),
    )(A_bf, xs, dsl, w, b)


def info_score(h, A_bf, dl):
    N, Hp = h.shape
    tm = _choose_tile(N)
    return pl.pallas_call(
        info_score_kernel,
        grid=(N // tm,),
        in_specs=[
            pl.BlockSpec((tm, N), lambda i: (i, 0)),      # A streams a second time
            pl.BlockSpec((N, Hp), lambda i: (0, 0)),      # h stays resident in VMEM
            pl.BlockSpec((N, 1), lambda i: (0, 0)),
        ],
        out_specs=pl.BlockSpec((tm, 1), lambda i: (i, 0)),
        out_shape=jax.ShapeDtypeStruct((N, 1), jnp.float32),
        compiler_params=pltpu.CompilerParams(
            dimension_semantics=("parallel",), vmem_limit_bytes=_VMEM_LIMIT),
    )(A_bf, h, dl)


def sl_attention(xk, att2, hop_k, mask):
    K, Hp = xk.shape
    tr = _choose_tile(K)
    return pl.pallas_call(
        sl_attention_kernel,
        grid=(K // tr,),
        in_specs=[
            pl.BlockSpec((K, Hp), lambda i: (0, 0)),
            pl.BlockSpec((2, Hp), lambda i: (0, 0)),
            pl.BlockSpec((tr, K), lambda i: (i, 0)),
            pl.BlockSpec((tr, K), lambda i: (i, 0)),
        ],
        out_specs=pl.BlockSpec((tr, K), lambda i: (i, 0)),
        out_shape=jax.ShapeDtypeStruct((K, K), jnp.float32),
        compiler_params=pltpu.CompilerParams(
            dimension_semantics=("parallel",), vmem_limit_bytes=_VMEM_LIMIT),
    )(xk, att2, hop_k, mask)


def conv3_readout_head(xk1, at1, an1, xk2, at2, an2, A2, params, num_graphs):
    d2 = jnp.sum(A2, axis=-1, keepdims=True)
    dsl2 = jax.lax.rsqrt(d2 + 1.0)
    Hp = xk2.shape[1]
    C = params["lin3_w"].shape[1]
    args = (xk1, at1, an1, xk2, at2, an2, A2.astype(jnp.bfloat16), dsl2,
            params["conv3_w"], params["conv3_b"],
            params["lin1_w_gmp"], params["lin1_w_gap"], params["lin1_b"],
            params["lin2_w"], params["lin2_b"],
            params["lin3_w"], params["lin3_b"])
    # TODO(synk): at very large K2 the conv3 A2 matmul should also be row-tiled;
    # at pool ratio 0.5^2 the pool2 graph is small, so single full blocks suffice here.
    return pl.pallas_call(
        conv3_readout_head_kernel,
        grid=(1,),
        in_specs=[_full(a.shape) for a in args],
        out_specs=_full((num_graphs, C)),
        out_shape=jax.ShapeDtypeStruct((num_graphs, C), jnp.float32),
        scratch_shapes=[pltpu.VMEM((num_graphs, Hp), jnp.float32)],
        compiler_params=pltpu.CompilerParams(
            dimension_semantics=("arbitrary",), vmem_limit_bytes=_VMEM_LIMIT),
    )(*args)


# ----------------------------------------------------------------------------
# plain-JAX glue
# ----------------------------------------------------------------------------
def gcn_layer(x_pad, A_f32, w_pad, b_pad):
    # TODO(synk): HGP-SL GCN adds self-loops only for nodes lacking them; here we
    # always add a weight-1 self-loop (deg + 1).
    d = jnp.sum(A_f32, axis=-1, keepdims=True)
    dsl = jax.lax.rsqrt(d + 1.0)
    dl = jnp.where(d > 0, jax.lax.rsqrt(jnp.maximum(d, 1e-12)), 0.0)
    A_bf = A_f32.astype(jnp.bfloat16)      # 0/1 adjacency exact; pooled adj ~3 digits
    xs = dsl * x_pad
    h = gcn_conv(xs, A_bf, dsl, w_pad, b_pad)
    s = info_score(h, A_bf, dl)
    return h, s


def k_hop_perm(A, perm, k=3):
    """<=k-hop reachability between the selected nodes, restricted to perm rows
    (intermediate hops may pass through any node). bf16 MXU matmuls.
    # TODO(synk): TwoHopNeighborhood coalesces edge_attr; here all hop edges get weight 1.0.
    """
    Ab = (A > 0).astype(jnp.bfloat16)
    Bp = jnp.take(Ab, perm, axis=0)                                  # (K, N)
    acc = jnp.take(Bp, perm, axis=1).astype(jnp.float32)             # 1-hop (K, K)
    reach = Bp
    for _ in range(k - 1):
        reach = (jnp.dot(reach, Ab, preferred_element_type=jnp.float32) > 0
                 ).astype(jnp.bfloat16)
        acc = jnp.maximum(acc, jnp.take(reach, perm, axis=1).astype(jnp.float32))
    return acc


def pool_and_attend(h, A_f32, score, batch, att_pad, num_graphs, nodes_per_graph, k):
    # TODO(synk): per-graph top-k + gathers stay in plain JAX; a further step would
    # scalar-prefetch `perm` (PrefetchScalarGridSpec) and gather rows directly into
    # sl_attention_kernel via Element index_maps instead of materializing xk/hop/mask in HBM.
    s = score.reshape(num_graphs, nodes_per_graph)
    _, idx = jax.lax.top_k(s, k)
    perm = (idx + (jnp.arange(num_graphs) * nodes_per_graph)[:, None]).reshape(-1)
    xk = jnp.take(h, perm, axis=0)
    batch_k = jnp.take(batch, perm)

    hop_k = k_hop_perm(A_f32, perm, 3)
    K = int(perm.shape[0])
    same = (batch_k[:, None] == batch_k[None, :]).astype(jnp.float32)
    hop_k = hop_k * same
    mask = jnp.maximum((hop_k > 0).astype(jnp.float32), jnp.eye(K, dtype=jnp.float32))

    A_new = sl_attention(xk, att_pad, hop_k, mask)

    # membership helpers for the fused readout+head kernel
    assign = (batch_k[None, :] == jnp.arange(num_graphs)[:, None]).astype(jnp.float32)
    cnt = jnp.sum(assign, axis=-1, keepdims=True)
    assign_norm = assign / jnp.maximum(cnt, 1.0)   # mean pool becomes a single matmul
    assign_t = assign.T                            # (K, G) for the masked max pool
    return xk, A_new, batch_k, assign_norm, assign_t


def forward(params, x, A, batch, num_graphs, nodes_per_graph):
    xp = _pad_lanes(x)                                    # features -> 128 lanes
    h1, score1 = gcn_layer(xp, A, params["conv1_w"], params["conv1_b"])
    k1 = int(math.ceil(POOL_RATIO * nodes_per_graph))
    xk1, A1, batch1, an1, at1 = pool_and_attend(h1, A, score1, batch, params["att1"],
                                                num_graphs, nodes_per_graph, k1)
    h2, score2 = gcn_layer(xk1, A1, params["conv2_w"], params["conv2_b"])
    k2 = int(math.ceil(POOL_RATIO * k1))
    xk2, A2, batch2, an2, at2 = pool_and_attend(h2, A1, score2, batch1, params["att2"],
                                                num_graphs, k1, k2)
    return conv3_readout_head(xk1, at1, an1, xk2, at2, an2, A2, params, num_graphs)


# ----------------------------------------------------------------------------
# deterministic parameter init (PyTorch-like shapes) + lane padding
# ----------------------------------------------------------------------------
def init_params(key, nfeat, nhid, nclass):
    keys = jax.random.split(key, 8)

    def lin(k, fi, fo):
        kw, kb = jax.random.split(k)
        w = jax.random.normal(kw, (fi, fo), jnp.float32) * (1.0 / math.sqrt(fi))
        b = jax.random.normal(kb, (1, fo), jnp.float32) * 0.01
        return w, b

    p = {}
    p["conv1_w"], p["conv1_b"] = lin(keys[0], nfeat, nhid)
    p["conv2_w"], p["conv2_b"] = lin(keys[1], nhid, nhid)
    p["conv3_w"], p["conv3_b"] = lin(keys[2], nhid, nhid)
    p["att1"] = jax.random.normal(keys[3], (1, 2 * nhid), jnp.float32) * 0.1
    p["att2"] = jax.random.normal(keys[4], (1, 2 * nhid), jnp.float32) * 0.1
    p["lin1_w"], p["lin1_b"] = lin(keys[5], 2 * nhid, nhid)
    p["lin2_w"], p["lin2_b"] = lin(keys[6], nhid, nhid // 2)
    p["lin3_w"], p["lin3_b"] = lin(keys[7], nhid // 2, nclass)
    return p


def pad_params(p, nhid):
    """Zero-pad hidden/feature slabs to 128 lanes so kernel outputs are lane-dense
    and MXU output-column utilization improves; padding is mathematically inert."""
    H = nhid
    q = {}
    q["conv1_w"] = _pad_lanes(_pad_lanes(p["conv1_w"], axis=1), axis=0)
    q["conv1_b"] = _pad_lanes(p["conv1_b"], axis=1)
    for n in ("conv2", "conv3"):
        q[n + "_w"] = _pad_lanes(_pad_lanes(p[n + "_w"], axis=1), axis=0)
        q[n + "_b"] = _pad_lanes(p[n + "_b"], axis=1)
    q["att1"] = _pad_lanes(p["att1"].reshape(2, H), axis=1)   # row 0 = a_src, row 1 = a_dst
    q["att2"] = _pad_lanes(p["att2"].reshape(2, H), axis=1)
    l1w = p["lin1_w"]
    q["lin1_w_gmp"] = _pad_lanes(_pad_lanes(l1w[:H, :], axis=1), axis=0)
    q["lin1_w_gap"] = _pad_lanes(_pad_lanes(l1w[H:, :], axis=1), axis=0)
    q["lin1_b"] = _pad_lanes(p["lin1_b"], axis=1)
    q["lin2_w"] = _pad_lanes(_pad_lanes(p["lin2_w"], axis=1), axis=0)
    q["lin2_b"] = _pad_lanes(p["lin2_b"], axis=1)
    q["lin3_w"] = _pad_lanes(p["lin3_w"], axis=0)             # classes stay unpadded
    q["lin3_b"] = p["lin3_b"]
    return q


if __name__ == "__main__":
    nfeat, nhid, nclass = 16, 32, 4
    num_graphs, nodes_per_graph = 2, 8
    N = num_graphs * nodes_per_graph

    key = jax.random.PRNGKey(0)
    kp, kx, ka = jax.random.split(key, 3)
    params = pad_params(init_params(kp, nfeat, nhid, nclass), nhid)

    x = jax.random.normal(kx, (N, nfeat), jnp.float32)

    # block-diagonal symmetric 0/1 adjacency, no self loops, 2 graphs x 8 nodes
    blocks = []
    for g in range(num_graphs):
        kg = jax.random.fold_in(ka, g)
        m = (jax.random.uniform(kg, (nodes_per_graph, nodes_per_graph)) < 0.45
             ).astype(jnp.float32)
        m = jnp.maximum(m, m.T)
        m = m * (1.0 - jnp.eye(nodes_per_graph, dtype=jnp.float32))
        blocks.append(m)
    A = jax.scipy.linalg.block_diag(*blocks)
    batch = jnp.repeat(jnp.arange(num_graphs, dtype=jnp.int32), nodes_per_graph)

    out = forward(params, x, A, batch, num_graphs, nodes_per_graph)
    out = jax.block_until_ready(out)
    assert out.shape == (num_graphs, nclass)
    assert bool(jnp.all(jnp.isfinite(out)))
    print("KERNEL_OK")
</pallas_src>

<mosaic_0001>
module attributes {stable_mosaic.version = 11 : i64} {
  func.func @gcn_conv_kernel(%arg0: i32, %arg1: memref<16x16xbf16, #tpu.memory_space<vmem>>, %arg2: memref<16x128xf32, #tpu.memory_space<vmem>>, %arg3: memref<16x1xf32, #tpu.memory_space<vmem>>, %arg4: memref<128x128xf32, #tpu.memory_space<vmem>>, %arg5: memref<1x128xf32, #tpu.memory_space<vmem>>, %arg6: memref<16x128xf32, #tpu.memory_space<vmem>>) attributes {dimension_semantics = [#tpu.dimension_semantics<parallel>], iteration_bounds = array<i64: 1>, scalar_prefetch = 0 : i64, scratch_operands = 0 : i64, tpu.core_type = #tpu.core_type<tc>, window_params = [{transform_indices = @transform_0, window_bounds = array<i64: 16, 16>}, {pipeline_mode = #tpu.pipeline_mode<synchronous>, transform_indices = @transform_1, window_bounds = array<i64: 16, 128>}, {pipeline_mode = #tpu.pipeline_mode<synchronous>, transform_indices = @transform_2, window_bounds = array<i64: 16, 1>}, {pipeline_mode = #tpu.pipeline_mode<synchronous>, transform_indices = @transform_3, window_bounds = array<i64: 128, 128>}, {pipeline_mode = #tpu.pipeline_mode<synchronous>, transform_indices = @transform_4, window_bounds = array<i64: 1, 128>}, {transform_indices = @transform_5, window_bounds = array<i64: 16, 128>}]} {
    %c16_i32 = arith.constant 16 : i32
    %0 = arith.muli %arg0, %c16_i32 : i32
    %1 = tpu.assume_multiple %0, 16 : i32
    %c0 = arith.constant 0 : index
    %c0_0 = arith.constant 0 : index
    %2 = vector.load %arg2[%c0, %c0_0] : memref<16x128xf32, #tpu.memory_space<vmem>>, vector<16x128xf32>
    %c0_1 = arith.constant 0 : index
    %c0_2 = arith.constant 0 : index
    %3 = vector.load %arg1[%c0_1, %c0_2] : memref<16x16xbf16, #tpu.memory_space<vmem>>, vector<16x16xbf16>
    %4 = arith.truncf %2 : vector<16x128xf32> to vector<16x128xbf16>
    %cst = arith.constant dense<0.000000e+00> : vector<16x128xf32>
    %5 = tpu.matmul %3, %4, %cst {dimension_numbers = #tpu.dot_dimension_numbers<[1], [0], [0], [1], [0, 0, 1, 1], [], []>} : vector<16x16xbf16>, vector<16x128xbf16>, vector<16x128xf32> -> vector<16x128xf32>
    %6 = arith.index_cast %1 : i32 to index
    %c0_3 = arith.constant 0 : index
    %7 = vector.load %arg3[%6, %c0_3] : memref<16x1xf32, #tpu.memory_space<vmem>>, vector<16x1xf32>
    %8 = arith.index_cast %1 : i32 to index
    %c0_4 = arith.constant 0 : index
    %9 = vector.load %arg2[%8, %c0_4] : memref<16x128xf32, #tpu.memory_space<vmem>>, vector<16x128xf32>
    %10 = arith.addf %5, %9 : vector<16x128xf32>
    %11 = vector.broadcast %7 : vector<16x1xf32> to vector<16x128xf32>
    %12 = arith.mulf %11, %10 : vector<16x128xf32>
    %c0_5 = arith.constant 0 : index
    %c0_6 = arith.constant 0 : index
    %13 = vector.load %arg4[%c0_5, %c0_6] : memref<128x128xf32, #tpu.memory_space<vmem>>, vector<128x128xf32>
    %cst_7 = arith.constant dense<0.000000e+00> : vector<16x128xf32>
    %14 = tpu.matmul %12, %13, %cst_7 {dimension_numbers = #tpu.dot_dimension_numbers<[1], [0], [0], [1], [0, 0, 1, 1], [], []>} : vector<16x128xf32>, vector<128x128xf32>, vector<16x128xf32> -> vector<16x128xf32>
    %c0_8 = arith.constant 0 : index
    %c0_9 = arith.constant 0 : index
    %15 = vector.load %arg5[%c0_8, %c0_9] : memref<1x128xf32, #tpu.memory_space<vmem>>, vector<1x128xf32>
    %16 = vector.broadcast %15 : vector<1x128xf32> to vector<16x128xf32>
    %17 = arith.addf %14, %16 : vector<16x128xf32>
    %cst_10 = arith.constant 0.000000e+00 : f32
    %18 = vector.broadcast %cst_10 : f32 to vector<16x128xf32>
    %19 = arith.maximumf %17, %18 : vector<16x128xf32>
    %c0_11 = arith.constant 0 : index
    %c0_12 = arith.constant 0 : index
    %20 = vector.load %arg6[%c0_11, %c0_12] : memref<16x128xf32, #tpu.memory_space<vmem>>, vector<16x128xf32>
    tpu.vector_store %arg6[%c0_11, %c0_12], %19 {strides = array<i32>} : memref<16x128xf32, #tpu.memory_space<vmem>>, vector<16x128xf32>,
    return
  }
  func.func @transform_0(%arg0: i32) -> (i32, i32) {
    %c0_i32 = arith.constant 0 : i32
    %c0_i32_0 = arith.constant 0 : i32
    return %arg0, %c0_i32 : i32, i32
  }
  func.func @transform_1(%arg0: i32) -> (i32, i32) {
    %c0_i32 = arith.constant 0 : i32
    %c0_i32_0 = arith.constant 0 : i32
    %c0_i32_1 = arith.constant 0 : i32
    return %c0_i32, %c0_i32_0 : i32, i32
  }
  func.func @transform_2(%arg0: i32) -> (i32, i32) {
    %c0_i32 = arith.constant 0 : i32
    %c0_i32_0 = arith.constant 0 : i32
    %c0_i32_1 = arith.constant 0 : i32
    return %c0_i32, %c0_i32_0 : i32, i32
  }
  func.func @transform_3(%arg0: i32) -> (i32, i32) {
    %c0_i32 = arith.constant 0 : i32
    %c0_i32_0 = arith.constant 0 : i32
    %c0_i32_1 = arith.constant 0 : i32
    return %c0_i32, %c0_i32_0 : i32, i32
  }
  func.func @transform_4(%arg0: i32) -> (i32, i32) {
    %c0_i32 = arith.constant 0 : i32
    %c0_i32_0 = arith.constant 0 : i32
    %c0_i32_1 = arith.constant 0 : i32
    return %c0_i32, %c0_i32_0 : i32, i32
  }
  func.func @transform_5(%arg0: i32) -> (i32, i32) {
    %c0_i32 = arith.constant 0 : i32
    %c0_i32_0 = arith.constant 0 : i32
    return %arg0, %c0_i32 : i32, i32
  }
}

</mosaic_0001>

<llo_original>
// kernel: tpu_custom_call.1
$region0: #{tpu_custom_call.1}
  #allocation0 [shape = 'u32[]', space=smem, size = 0x4, offset = 0x4, fixed_abs, tag = 'smem constant byte address 0x4 - core index']
  #allocation1 [shape = 'u32[144,128]{1,0:T(1,128)}', space=vmem, size = 0x12000, scoped, tag = 'internal scratch']
  %s0 = inlined_call_operand.hbm [shape: bf16[16,16], index: 0, kind: input, shape index: {}]
  %s1 = inlined_call_operand.vmem [shape: f32[16,128], index: 1, kind: input, shape index: {}]
  %s2 = inlined_call_operand.vmem [shape: f32[16,1], index: 2, kind: input, shape index: {}]
  %s3 = inlined_call_operand.hbm [shape: f32[128,128], index: 3, kind: input, shape index: {}]
  %s4 = inlined_call_operand.vmem [shape: f32[1,128], index: 4, kind: input, shape index: {}]
  %s5 = inlined_call_operand.hbm [shape: f32[16,128], index: 5, kind: output, shape index: {}]
  %s6 = sld [smem:[#allocation0]]
  $region38: #{tpu_custom_call.1} parent=0
    _
  %s8 = ssub.s32 1, %s6
  %s9 = scalar_select 0, %s8, %s6
  $region1: #{tpu_custom_call.1} parent=0
    #allocation2 [shape = 'u8[4096]{0}', space=vmem, size = 0x1000, scoped, tag = 'input window, operand 0, single buffered']
    #allocation3 [shape = 's32[1]{0}', space=sflag, size = 0x4, scoped, tag = 'scoped memory for tpu_custom_call.1']
    #allocation4 [shape = 's32[1]{0}', space=sflag, size = 0x4, scoped, tag = 'scoped memory for tpu_custom_call.1']
    #allocation5 [shape = 'u8[65536]{0}', space=vmem, size = 0x10000, scoped, tag = 'input window, operand 3, single buffered']
    #allocation6 [shape = 's32[1]{0}', space=sflag, size = 0x4, scoped, tag = 'scoped memory for tpu_custom_call.1']
    #allocation7 [shape = 'u8[8192]{0}', space=vmem, size = 0x2000, scoped, tag = 'output window, operand 0, single buffered']
    %10 = vsyncpa [#allocation3], 0
    %11 = vsyncpa [#allocation6], 0
    %12 = vsyncpa [#allocation4], 0
    // Predicated region
    $region2: #{tpu_custom_call.1} parent=1 // pred_check
      _
    $region3: #{tpu_custom_call.1} parent=1 // pred_check_branch
      %14 = sbr.rel (0) target = $region5
    $region4: #{tpu_custom_call.1} parent=1 // pred_region
      %s16 = ssub.s32 128, 128
      %17 = vsyncadd [#allocation3], %s16
      %s18 = sshll.u32 [#allocation2], 4
      %s19 = int_to_ptr.vmem [resolvable:$true] %s18
      %24 = dma.hbm_to_vmem [thread:$0]  %s0, 128, %s19, [#allocation3], 64, 64, 4
    $region5: #{tpu_custom_call.1} parent=1 // pred_fallthru
      _
    // Predicated region
    $region6: #{tpu_custom_call.1} parent=1 // pred_check
      _
    $region7: #{tpu_custom_call.1} parent=1 // pred_check_branch
      %26 = sbr.rel (0) target = $region9
    $region8: #{tpu_custom_call.1} parent=1 // pred_region
      _
    $region9: #{tpu_custom_call.1} parent=1 // pred_fallthru
      _
    // Predicated region
    $region10: #{tpu_custom_call.1} parent=1 // pred_check
      _
    $region11: #{tpu_custom_call.1} parent=1 // pred_check_branch
      %28 = sbr.rel (0) target = $region13
    $region12: #{tpu_custom_call.1} parent=1 // pred_region
      _
    $region13: #{tpu_custom_call.1} parent=1 // pred_fallthru
      _
    // Predicated region
    $region14: #{tpu_custom_call.1} parent=1 // pred_check
      _
    $region15: #{tpu_custom_call.1} parent=1 // pred_check_branch
      %30 = sbr.rel (0) target = $region17
    $region16: #{tpu_custom_call.1} parent=1 // pred_region
      %s32 = ssub.s32 2048, 2048
      %33 = vsyncadd [#allocation6], %s32
      %s34 = sshll.u32 [#allocation5], 4
      %s35 = int_to_ptr.vmem [resolvable:$true] %s34
      %40 = dma.hbm_to_vmem [thread:$0]  %s3, 2048, %s35, [#allocation6], 128, 128, 8
    $region17: #{tpu_custom_call.1} parent=1 // pred_fallthru
      _
    // Predicated region
    $region18: #{tpu_custom_call.1} parent=1 // pred_check
      _
    $region19: #{tpu_custom_call.1} parent=1 // pred_check_branch
      %42 = sbr.rel (0) target = $region21
    $region20: #{tpu_custom_call.1} parent=1 // pred_region
      _
    $region21: #{tpu_custom_call.1} parent=1 // pred_fallthru
      _
    // Predicated region
    $region22: #{tpu_custom_call.1} parent=1 // pred_check
      _
    $region23: #{tpu_custom_call.1} parent=1 // pred_check_branch
      %44 = sbr.rel (0) target = $region25
    $region24: #{tpu_custom_call.1} parent=1 // pred_region
      %45 = dma.done [#allocation3], 128
    $region25: #{tpu_custom_call.1} parent=1 // pred_fallthru
      _
    // Predicated region
    $region26: #{tpu_custom_call.1} parent=1 // pred_check
      _
    $region27: #{tpu_custom_call.1} parent=1 // pred_check_branch
      %47 = sbr.rel (0) target = $region29
    $region28: #{tpu_custom_call.1} parent=1 // pred_region
      %48 = dma.done [#allocation6], 2048
    $region29: #{tpu_custom_call.1} parent=1 // pred_fallthru
      _
    %s50 = smul.u32 0, 16
    %v51 = vld [vmem:[%s1] sm:$0xff]
    %v52 = vld [vmem:[%s1 + $0x8] sm:$0xff]
    %v53 = vld [vmem:[#allocation2] sm:$0xf]
    %v54 = vld [vmem:[#allocation2 + $0x4] sm:$0xf]
    %v55 = vpack.c.bf16 %v52, %v51
    %s56 = scalar_lea.vmem %s2, %s50
    %v57 = vld [vmem:[%s56] sm:$0xff]
    %v58 = vld [vmem:[%s56 + $0x8] sm:$0xff]
    %s59 = scalar_lea.vmem %s1, %s50
    %v60 = vld [vmem:[%s59] sm:$0xff]
    %v61 = vld [vmem:[%s59 + $0x8] sm:$0xff]
    %v64 = vunpack.c.l.b16 %v53
    %v65 = vunpack.c.l.b16 %v54
    %v66 = vpack.c.b16 %v65, %v64
    %vm67 = vcmask 130048
    %v69 = vsel %vm67, %v66, 0
    %71 = vmatprep.subr.bf16.mxu0 0
    %72 = vmatpush1.bf16.msra.mxu0 %v55
    %73 = vmatprep.subr.bf16.mxu0 0
    %74 = vmatpush1.bf16.msra.mxu0 0
    %75 = vmatprep.subr.bf16.mxu0 0
    %76 = vmatpush1.bf16.msra.mxu0 0
    %77 = vmatprep.subr.bf16.mxu0 0
    %78 = vmatpush1.bf16.msra.mxu0 0
    %79 = vmatprep.subr.bf16.mxu0 0
    %80 = vmatpush1.bf16.msra.mxu0 0
    %81 = vmatprep.subr.bf16.mxu0 0
    %82 = vmatpush1.bf16.msra.mxu0 0
    %83 = vmatprep.subr.bf16.mxu0 0
    %84 = vmatpush1.bf16.msra.mxu0 0
    %85 = vmatprep.subr.bf16.mxu0 0
    %86 = vmatpush1.bf16.msra.mxu0 0
    %87 = vmatprep.subr.bf16.mxu0 0
    %88 = vmatpush1.bf16.msra.mxu0 0
    %89 = vmatprep.subr.bf16.mxu0 0
    %90 = vmatpush1.bf16.msra.mxu0 0
    %91 = vmatprep.subr.bf16.mxu0 0
    %92 = vmatpush1.bf16.msra.mxu0 0
    %93 = vmatprep.subr.bf16.mxu0 0
    %94 = vmatpush1.bf16.msra.mxu0 0
    %95 = vmatprep.subr.bf16.mxu0 0
    %96 = vmatpush1.bf16.msra.mxu0 0
    %97 = vmatprep.subr.bf16.mxu0 0
    %98 = vmatpush1.bf16.msra.mxu0 0
    %99 = vmatprep.subr.bf16.mxu0 0
    %100 = vmatpush1.bf16.msra.mxu0 0
    %101 = vmatprep.subr.bf16.mxu0 0
    %102 = vmatpush1.bf16.msra.mxu0 0
    %103 = vmatprep.mubr.bf16.mxu0 0
    %104 = vmatmul.mubr.bf16.gmra.mrb[0].mxu0 %v69
    %v105 = vpop.f32.mrb[0].mxu0
    %v106 = vadd.f32 %v60, %v105
    %v107 = vpop.f32.mrb[0].mxu0
    %v108 = vpop.f32.mrb[0].mxu0
    %v109 = vadd.f32 %v61, %v108
    %v110 = vpop.f32.mrb[0].mxu0
    %111 = vdwg.mxu0
    %113 = vset.pattern.permute.xlu0 0
    %114 = vperm.xlu0 %113, %v57
    %v115 = vpop.permute.xlu0 %114
    %118 = vset.pattern.permute.xlu0 0
    %119 = vperm.xlu0 %118, %v58
    %v120 = vpop.permute.xlu0 %119
    %v122 = vmul.f32 %v115, %v106
    %v123 = vmul.f32 %v120, %v109
    %v124 = vld [vmem:[#allocation5] sm:$0xff]
    %v125 = vld [vmem:[#allocation5 + $0x8] sm:$0xff]
    %v126 = vld [vmem:[#allocation5 + $0x10] sm:$0xff]
    %v127 = vld [vmem:[#allocation5 + $0x18] sm:$0xff]
    %v128 = vld [vmem:[#allocation5 + $0x20] sm:$0xff]
    %v129 = vld [vmem:[#allocation5 + $0x28] sm:$0xff]
    %v130 = vld [vmem:[#allocation5 + $0x30] sm:$0xff]
    %v131 = vld [vmem:[#allocation5 + $0x38] sm:$0xff]
    %v132 = vld [vmem:[#allocation5 + $0x40] sm:$0xff]
    %v133 = vld [vmem:[#allocation5 + $0x48] sm:$0xff]
    %v134 = vld [vmem:[#allocation5 + $0x50] sm:$0xff]
    %v135 = vld [vmem:[#allocation5 + $0x58] sm:$0xff]
    %v136 = vld [vmem:[#allocation5 + $0x60] sm:$0xff]
    %v137 = vld [vmem:[#allocation5 + $0x68] sm:$0xff]
    %v138 = vld [vmem:[#allocation5 + $0x70] sm:$0xff]
    %v139 = vld [vmem:[#allocation5 + $0x78] sm:$0xff]
    %v140 = vld [vmem:[%s4] sm:$0x1]
    %v142 = vlaneseq
    %v143 = vshrl.u32 %v142, 7
    %v144 = vsub.s32 0, %v143
    %v145 = vrot.slane %v140, %v144
    %147 = vmatprep.subr.mxu0 0.0
    %148 = vmatpush1.msra.mxu0 %v124
    %149 = vmatprep.subr.mxu0 0.0
    %150 = vmatpush1.msra.mxu0 %v125
    %151 = vmatprep.subr.mxu0 0.0
    %152 = vmatpush1.msra.mxu0 %v126
    %153 = vmatprep.subr.mxu0 0.0
    %154 = vmatpush1.msra.mxu0 %v127
    %155 = vmatprep.subr.mxu0 0.0
    %156 = vmatpush1.msra.mxu0 %v128
    %157 = vmatprep.subr.mxu0 0.0
    %158 = vmatpush1.msra.mxu0 %v129
    %159 = vmatprep.subr.mxu0 0.0
    %160 = vmatpush1.msra.mxu0 %v130
    %161 = vmatprep.subr.mxu0 0.0
    %162 = vmatpush1.msra.mxu0 %v131
    %163 = vmatprep.subr.mxu0 0.0
    %164 = vmatpush1.msra.mxu0 %v132
    %165 = vmatprep.subr.mxu0 0.0
    %166 = vmatpush1.msra.mxu0 %v133
    %167 = vmatprep.subr.mxu0 0.0
    %168 = vmatpush1.msra.mxu0 %v134
    %169 = vmatprep.subr.mxu0 0.0
    %170 = vmatpush1.msra.mxu0 %v135
    %171 = vmatprep.subr.mxu0 0.0
    %172 = vmatpush1.msra.mxu0 %v136
    %173 = vmatprep.subr.mxu0 0.0
    %174 = vmatpush1.msra.mxu0 %v137
    %175 = vmatprep.subr.mxu0 0.0
    %176 = vmatpush1.msra.mxu0 %v138
    %177 = vmatprep.subr.mxu0 0.0
    %178 = vmatpush1.msra.mxu0 %v139
    %179 = vmatprep.subr.mxu0 0.0
    %180 = vmatpush1.msra.mxu0 0.0
    %181 = vmatprep.subr.mxu0 0.0
    %182 = vmatpush1.msra.mxu0 0.0
    %183 = vmatprep.subr.mxu0 0.0
    %184 = vmatpush1.msra.mxu0 0.0
    %185 = vmatprep.subr.mxu0 0.0
    %186 = vmatpush1.msra.mxu0 0.0
    %187 = vmatprep.subr.mxu0 0.0
    %188 = vmatpush1.msra.mxu0 0.0
    %189 = vmatprep.subr.mxu0 0.0
    %190 = vmatpush1.msra.mxu0 0.0
    %191 = vmatprep.subr.mxu0 0.0
    %192 = vmatpush1.msra.mxu0 0.0
    %193 = vmatprep.subr.mxu0 0.0
    %194 = vmatpush1.msra.mxu0 0.0
    %195 = vmatprep.subr.mxu0 0.0
    %196 = vmatpush1.msra.mxu0 0.0
    %197 = vmatprep.subr.mxu0 0.0
    %198 = vmatpush1.msra.mxu0 0.0
    %199 = vmatprep.subr.mxu0 0.0
    %200 = vmatpush1.msra.mxu0 0.0
    %201 = vmatprep.subr.mxu0 0.0
    %202 = vmatpush1.msra.mxu0 0.0
    %203 = vmatprep.subr.mxu0 0.0
    %204 = vmatpush1.msra.mxu0 0.0
    %205 = vmatprep.subr.mxu0 0.0
    %206 = vmatpush1.msra.mxu0 0.0
    %207 = vmatprep.subr.mxu0 0.0
    %208 = vmatpush1.msra.mxu0 0.0
    %209 = vmatprep.subr.mxu0 0.0
    %210 = vmatpush1.msra.mxu0 0.0
    %211 = vmatprep.mubr.f32.mxu0 0.0
    %212 = vmatmul.mubr.f32.gmra.mrb[0].mxu0 %v122
    %v213 = vpop.f32.mrb[0].mxu0
    %v214 = vadd.f32 %v145, %v213
    %v215 = vpop.f32.mrb[0].mxu0
    %216 = vmatprep.mubr.f32.mxu0 0.0
    %217 = vmatmul.mubr.f32.gmra.mrb[0].mxu0 %v123
    %v218 = vpop.f32.mrb[0].mxu0
    %v219 = vadd.f32 %v145, %v218
    %v220 = vpop.f32.mrb[0].mxu0
    %221 = vdwg.mxu0
    %v222 = vmax.f32 %v214, 0.0
    %v223 = vmax.f32 %v219, 0.0
    %224 = vst [vmem:[#allocation7] sm:$0xff] %v222
    %225 = vst [vmem:[#allocation7 + $0x8] sm:$0xff] %v223
    // Predicated region
    $region30: #{tpu_custom_call.1} parent=1 // pred_check
      _
    $region31: #{tpu_custom_call.1} parent=1 // pred_check_branch
      %227 = sbr.rel (0) target = $region33
    $region32: #{tpu_custom_call.1} parent=1 // pred_region
      %s229 = ssub.s32 256, 256
      %230 = vsyncadd [#allocation4], %s229
      %s231 = sshll.u32 [#allocation7], 4
      %s232 = int_to_ptr.vmem [resolvable:$true] %s231
      %237 = dma.vmem_to_hbm [thread:$0]  %s232, 256, %s5, [#allocation4], 128, 128, 8
    $region33: #{tpu_custom_call.1} parent=1 // pred_fallthru
      _
    // Predicated region
    $region34: #{tpu_custom_call.1} parent=1 // pred_check
      _
    $region35: #{tpu_custom_call.1} parent=1 // pred_check_branch
      %239 = sbr.rel (0) target = $region37
    $region36: #{tpu_custom_call.1} parent=1 // pred_region
      %240 = dma.done [#allocation4], 256
    $region37: #{tpu_custom_call.1} parent=1 // pred_fallthru
      _
    %241 = vsyncpa [#allocation3], 1
    %242 = vsyncpa [#allocation6], 1
    %243 = vsyncpa [#allocation4], 1

</llo_original>
